<compile_context>
chip_gen: v6e
topology: v6e:2x2x1
jax: 0.10.0
libtpu: 0.0.40
codegen_flags: <defaults>
</compile_context>

<pallas_src>
import functools

import jax
import jax.numpy as jnp
import numpy as np
from jax.experimental import pallas as pl
from jax.experimental.pallas import tpu as pltpu

EPS = 1e-5


def _round_up(v, m):
    return (v + m - 1) // m * m


def _residual_block_kernel(x_ref, w1_ref, w2_ref, g1_ref, b1_ref, g2_ref, b2_ref,
                           out_ref, *, L, Lp):
    """x_ref: (R, Cp) f32 (R = N*Lp, zero at padded rows/channels).
    w*_ref: (3*Cp, Cp) bf16 fused-tap weights. g*/b*: (1, Cp) f32 BN affine.
    out_ref: (R, Cp) f32."""
    R, Cp = x_ref.shape
    n_batch = R // Lp
    inv_cnt = 1.0 / float(n_batch * L)          # BN counts only valid (non-pad) rows

    x = x_ref[...]                               # (R, Cp) f32

    # Per-row position within each sequence (no remainder op: 3-D iota + reshape).
    l_loc = jax.lax.broadcasted_iota(jnp.int32, (n_batch, Lp, Cp), 1).reshape(R, Cp)
    keep_prev = jnp.logical_and(l_loc > 0, l_loc < L)   # tap l-1 invalid at l==0 / pad rows
    keep_next = l_loc < (L - 1)                         # tap l+1 invalid at l==L-1 / pad rows

    def tap3(t):
        # t: (R, Cp) f32, zero at padded rows.  Returns fused im2col LHS (R, 3*Cp) bf16.
        # Shifts along L are sublane rolls (XLU, f32 path) + boundary masks; taps are
        # cast to bf16 before the lane-concat so the wide intermediate is half-size.
        t_prev = jnp.where(keep_prev, pltpu.roll(t, 1, axis=0), 0.0).astype(jnp.bfloat16)
        t_next = jnp.where(keep_next, pltpu.roll(t, R - 1, axis=0), 0.0).astype(jnp.bfloat16)
        return jnp.concatenate([t_prev, t.astype(jnp.bfloat16), t_next], axis=-1)

    def bn_fold(acc, g_ref, b_ref):
        # One-pass batch stats (biased var), folded to a single per-channel scale/shift.
        s = jnp.sum(acc, axis=0, keepdims=True)
        ss = jnp.sum(acc * acc, axis=0, keepdims=True)
        mu = s * inv_cnt
        var = jnp.maximum(ss * inv_cnt - mu * mu, 0.0)
        scale = g_ref[...] * jax.lax.rsqrt(var + EPS)    # (1, Cp) EUP op
        shift = b_ref[...] - mu * scale
        return scale, shift

    # ---- conv1 (bias omitted: cancelled by BN) + bn1 + relu ----
    acc1 = jnp.dot(tap3(x), w1_ref[...], preferred_element_type=jnp.float32)
    sc1, sh1 = bn_fold(acc1, g1_ref, b1_ref)
    h = jnp.maximum(acc1 * sc1 + sh1, 0.0)
    if Lp != L:                                   # keep padded rows exactly zero
        h = jnp.where(l_loc < L, h, 0.0)

    # ---- conv2 + bn2 + residual + relu ----
    acc2 = jnp.dot(tap3(h), w2_ref[...], preferred_element_type=jnp.float32)
    sc2, sh2 = bn_fold(acc2, g2_ref, b2_ref)
    out_ref[...] = jnp.maximum(acc2 * sc2 + sh2 + x, 0.0)


def residual_block(x_ncl, params):
    """x_ncl: (N, C, L) float32 (PyTorch Conv1d layout). Returns (N, C, L)."""
    w1, b1, g1, be1, w2, b2, g2, be2 = params
    del b1, b2  # conv biases are mathematically cancelled by training-mode BatchNorm
    N, Cin, L = x_ncl.shape
    Cout = w1.shape[0]
    assert Cin == Cout, "downsample=None requires in_channels == out_channels"
    C = Cout
    Cp = _round_up(C, 128)        # lane-dense channels
    Lp = _round_up(L, 8)          # sublane-aligned sequence length
    R = N * Lp

    # x: NCL -> NLC, zero-pad L->Lp and C->Cp, flatten rows. Single f32 input
    # (serves both the conv im2col source and the residual at full precision).
    x_nlc = jnp.transpose(x_ncl, (0, 2, 1)).astype(jnp.float32)
    x2d = jnp.zeros((N, Lp, Cp), jnp.float32).at[:, :L, :C].set(x_nlc).reshape(R, Cp)

    def prep_w(w):
        wk = jnp.transpose(w, (2, 1, 0)).astype(jnp.float32)          # (3, Cin, Cout)
        wp = jnp.zeros((3, Cp, Cp), jnp.float32).at[:, :C, :C].set(wk)
        return wp.reshape(3 * Cp, Cp).astype(jnp.bfloat16)            # fused-tap weights

    w1f, w2f = prep_w(w1), prep_w(w2)

    def prep_v(v):
        return jnp.zeros((1, Cp), jnp.float32).at[0, :C].set(v.astype(jnp.float32))

    g1r, be1r, g2r, be2r = (prep_v(v) for v in (g1, be1, g2, be2))

    kernel = functools.partial(_residual_block_kernel, L=L, Lp=Lp)

    # VMEM budget: input/output/activation temps (~12 f32 passes of (R, Cp)) + weights.
    est = R * Cp * 4 * 12 + 2 * (3 * Cp * Cp * 2) + 4 * (Cp * 4)
    vmem_limit = int(min(64 * 2**20, max(32 * 2**20, 2 * est)))

    def fs(shape):
        nd = len(shape)
        return pl.BlockSpec(shape, lambda i, nd=nd: (0,) * nd)

    out2d = pl.pallas_call(
        kernel,
        out_shape=jax.ShapeDtypeStruct((R, Cp), jnp.float32),
        grid=(1,),
        in_specs=[fs(x2d.shape), fs(w1f.shape), fs(w2f.shape),
                  fs(g1r.shape), fs(be1r.shape), fs(g2r.shape), fs(be2r.shape)],
        out_specs=fs((R, Cp)),
        compiler_params=pltpu.CompilerParams(
            dimension_semantics=("arbitrary",),
            vmem_limit_bytes=vmem_limit),
    )(x2d, w1f, w2f, g1r, be1r, g2r, be2r)

    out = out2d.reshape(N, Lp, Cp)[:, :L, :C]
    return jnp.transpose(out, (0, 2, 1))


def _reference(x_ncl, params, conv_dtype=jnp.float32):
    """Pure-JAX reference mirroring PyTorch training-mode forward.
    conv_dtype=bfloat16 mirrors the kernel's MXU input precision (f32 accumulation)."""
    w1, b1, g1, be1, w2, b2, g2, be2 = params

    def conv1d(x, w, b):
        y = jax.lax.conv_general_dilated(
            x.astype(conv_dtype), w.astype(conv_dtype),
            window_strides=(1,), padding=[(1, 1)],
            dimension_numbers=("NCH", "OIH", "NCH"),
            preferred_element_type=jnp.float32)
        return y + b[None, :, None]

    def bn(x, g, be):
        mu = jnp.mean(x, axis=(0, 2), keepdims=True)
        var = jnp.mean((x - mu) ** 2, axis=(0, 2), keepdims=True)
        return (x - mu) * jax.lax.rsqrt(var + EPS) * g[None, :, None] + be[None, :, None]

    out = jax.nn.relu(bn(conv1d(x_ncl, w1, b1), g1, be1))
    out = bn(conv1d(out, w2, b2), g2, be2)
    return jax.nn.relu(out + x_ncl)


if __name__ == "__main__":
    N, C, L = 2, 4, 16
    key = jax.random.PRNGKey(0)
    ks = jax.random.split(key, 9)
    x = jax.random.normal(ks[0], (N, C, L), jnp.float32)

    params = (
        0.1 * jax.random.normal(ks[1], (C, C, 3), jnp.float32),   # conv1.weight (Cout, Cin, 3)
        0.1 * jax.random.normal(ks[2], (C,), jnp.float32),        # conv1.bias
        1.0 + 0.1 * jax.random.normal(ks[3], (C,), jnp.float32),  # bn1.weight (gamma)
        0.1 * jax.random.normal(ks[4], (C,), jnp.float32),        # bn1.bias (beta)
        0.1 * jax.random.normal(ks[5], (C, C, 3), jnp.float32),   # conv2.weight
        0.1 * jax.random.normal(ks[6], (C,), jnp.float32),        # conv2.bias
        1.0 + 0.1 * jax.random.normal(ks[7], (C,), jnp.float32),  # bn2.weight
        0.1 * jax.random.normal(ks[8], (C,), jnp.float32),        # bn2.bias
    )

    out = jax.block_until_ready(residual_block(x, params))

    # Tight check against a reference that mirrors the kernel's precision
    # (bf16 MXU inputs, f32 accumulation / BN math).
    ref_bf16 = jax.block_until_ready(_reference(x, params, conv_dtype=jnp.bfloat16))
    np.testing.assert_allclose(np.asarray(out), np.asarray(ref_bf16), rtol=1e-2, atol=1e-2)

    # Loose check against pure-f32 PyTorch training-mode semantics
    # (difference dominated by bf16 rounding of the matmul operands).
    ref_f32 = jax.block_until_ready(_reference(x, params, conv_dtype=jnp.float32))
    np.testing.assert_allclose(np.asarray(out), np.asarray(ref_f32), rtol=5e-2, atol=5e-2)

    print("KERNEL_OK")
</pallas_src>

<mosaic_0001>
module attributes {stable_mosaic.version = 11 : i64} {
  func.func @_residual_block_kernel(%arg0: i32, %arg1: memref<32x128xf32, #tpu.memory_space<vmem>>, %arg2: memref<384x128xbf16, #tpu.memory_space<vmem>>, %arg3: memref<384x128xbf16, #tpu.memory_space<vmem>>, %arg4: memref<1x128xf32, #tpu.memory_space<vmem>>, %arg5: memref<1x128xf32, #tpu.memory_space<vmem>>, %arg6: memref<1x128xf32, #tpu.memory_space<vmem>>, %arg7: memref<1x128xf32, #tpu.memory_space<vmem>>, %arg8: memref<32x128xf32, #tpu.memory_space<vmem>>) attributes {dimension_semantics = [#tpu.dimension_semantics<arbitrary>], iteration_bounds = array<i64: 1>, scalar_prefetch = 0 : i64, scratch_operands = 0 : i64, tpu.core_type = #tpu.core_type<tc>, window_params = [{pipeline_mode = #tpu.pipeline_mode<synchronous>, transform_indices = @transform_0, window_bounds = array<i64: 32, 128>}, {pipeline_mode = #tpu.pipeline_mode<synchronous>, transform_indices = @transform_1, window_bounds = array<i64: 384, 128>}, {pipeline_mode = #tpu.pipeline_mode<synchronous>, transform_indices = @transform_2, window_bounds = array<i64: 384, 128>}, {pipeline_mode = #tpu.pipeline_mode<synchronous>, transform_indices = @transform_3, window_bounds = array<i64: 1, 128>}, {pipeline_mode = #tpu.pipeline_mode<synchronous>, transform_indices = @transform_4, window_bounds = array<i64: 1, 128>}, {pipeline_mode = #tpu.pipeline_mode<synchronous>, transform_indices = @transform_5, window_bounds = array<i64: 1, 128>}, {pipeline_mode = #tpu.pipeline_mode<synchronous>, transform_indices = @transform_6, window_bounds = array<i64: 1, 128>}, {pipeline_mode = #tpu.pipeline_mode<synchronous>, transform_indices = @transform_7, window_bounds = array<i64: 32, 128>}]} {
    %c0 = arith.constant 0 : index
    %c0_0 = arith.constant 0 : index
    %0 = vector.load %arg1[%c0, %c0_0] : memref<32x128xf32, #tpu.memory_space<vmem>>, vector<32x128xf32>
    %1 = tpu.iota {dimensions = array<i32: 1>} : vector<2x16x128xi32>
    %2 = vector.shape_cast %1 : vector<2x16x128xi32> to vector<32x128xi32>
    %c0_i32 = arith.constant 0 : i32
    %3 = vector.broadcast %c0_i32 : i32 to vector<32x128xi32>
    %4 = arith.cmpi sgt, %2, %3 : vector<32x128xi32>
    %c16_i32 = arith.constant 16 : i32
    %5 = vector.broadcast %c16_i32 : i32 to vector<32x128xi32>
    %6 = arith.cmpi slt, %2, %5 : vector<32x128xi32>
    %7 = arith.andi %4, %6 : vector<32x128xi1>
    %c15_i32 = arith.constant 15 : i32
    %8 = vector.broadcast %c15_i32 : i32 to vector<32x128xi32>
    %9 = arith.cmpi slt, %2, %8 : vector<32x128xi32>
    %c1_i32 = arith.constant 1 : i32
    %10 = tpu.dynamic_rotate %0 by %c1_i32 dim 0 : vector<32x128xf32>, i32 -> vector<32x128xf32>
    %cst = arith.constant 0.000000e+00 : f32
    %11 = vector.broadcast %cst : f32 to vector<32x128xf32>
    %12 = arith.select %7, %10, %11 : vector<32x128xi1>, vector<32x128xf32>
    %13 = arith.truncf %12 : vector<32x128xf32> to vector<32x128xbf16>
    %c31_i32 = arith.constant 31 : i32
    %14 = tpu.dynamic_rotate %0 by %c31_i32 dim 0 : vector<32x128xf32>, i32 -> vector<32x128xf32>
    %cst_1 = arith.constant 0.000000e+00 : f32
    %15 = vector.broadcast %cst_1 : f32 to vector<32x128xf32>
    %16 = arith.select %9, %14, %15 : vector<32x128xi1>, vector<32x128xf32>
    %17 = arith.truncf %16 : vector<32x128xf32> to vector<32x128xbf16>
    %18 = arith.truncf %0 : vector<32x128xf32> to vector<32x128xbf16>
    %19 = tpu.concatenate %13, %18, %17 in 1 : vector<32x128xbf16>, vector<32x128xbf16>, vector<32x128xbf16> -> vector<32x384xbf16>
    %c0_2 = arith.constant 0 : index
    %c0_3 = arith.constant 0 : index
    %20 = vector.load %arg2[%c0_2, %c0_3] : memref<384x128xbf16, #tpu.memory_space<vmem>>, vector<384x128xbf16>
    %cst_4 = arith.constant dense<0.000000e+00> : vector<32x128xf32>
    %21 = tpu.matmul %19, %20, %cst_4 {dimension_numbers = #tpu.dot_dimension_numbers<[1], [0], [0], [1], [0, 0, 1, 1], [], []>} : vector<32x384xbf16>, vector<384x128xbf16>, vector<32x128xf32> -> vector<32x128xf32>
    %cst_5 = arith.constant dense<0.000000e+00> : vector<128xf32>
    %22 = vector.multi_reduction <add>, %21, %cst_5 [0] : vector<32x128xf32> to vector<128xf32>
    %23 = vector.shape_cast %22 : vector<128xf32> to vector<1x128xf32>
    %24 = arith.mulf %21, %21 : vector<32x128xf32>
    %cst_6 = arith.constant dense<0.000000e+00> : vector<128xf32>
    %25 = vector.multi_reduction <add>, %24, %cst_6 [0] : vector<32x128xf32> to vector<128xf32>
    %26 = vector.shape_cast %25 : vector<128xf32> to vector<1x128xf32>
    %cst_7 = arith.constant 3.125000e-02 : f32
    %27 = vector.broadcast %cst_7 : f32 to vector<1x128xf32>
    %28 = arith.mulf %23, %27 : vector<1x128xf32>
    %cst_8 = arith.constant 3.125000e-02 : f32
    %29 = vector.broadcast %cst_8 : f32 to vector<1x128xf32>
    %30 = arith.mulf %26, %29 : vector<1x128xf32>
    %31 = arith.mulf %28, %28 : vector<1x128xf32>
    %32 = arith.subf %30, %31 : vector<1x128xf32>
    %cst_9 = arith.constant 0.000000e+00 : f32
    %33 = vector.broadcast %cst_9 : f32 to vector<1x128xf32>
    %34 = arith.maximumf %32, %33 : vector<1x128xf32>
    %c0_10 = arith.constant 0 : index
    %c0_11 = arith.constant 0 : index
    %35 = vector.load %arg4[%c0_10, %c0_11] : memref<1x128xf32, #tpu.memory_space<vmem>>, vector<1x128xf32>
    %cst_12 = arith.constant 9.99999974E-6 : f32
    %36 = vector.broadcast %cst_12 : f32 to vector<1x128xf32>
    %37 = arith.addf %34, %36 : vector<1x128xf32>
    %38 = math.rsqrt %37 : vector<1x128xf32>
    %39 = arith.mulf %35, %38 : vector<1x128xf32>
    %c0_13 = arith.constant 0 : index
    %c0_14 = arith.constant 0 : index
    %40 = vector.load %arg5[%c0_13, %c0_14] : memref<1x128xf32, #tpu.memory_space<vmem>>, vector<1x128xf32>
    %41 = arith.mulf %28, %39 : vector<1x128xf32>
    %42 = arith.subf %40, %41 : vector<1x128xf32>
    %43 = vector.broadcast %39 : vector<1x128xf32> to vector<32x128xf32>
    %44 = arith.mulf %21, %43 : vector<32x128xf32>
    %45 = vector.broadcast %42 : vector<1x128xf32> to vector<32x128xf32>
    %46 = arith.addf %44, %45 : vector<32x128xf32>
    %cst_15 = arith.constant 0.000000e+00 : f32
    %47 = vector.broadcast %cst_15 : f32 to vector<32x128xf32>
    %48 = arith.maximumf %46, %47 : vector<32x128xf32>
    %c1_i32_16 = arith.constant 1 : i32
    %49 = tpu.dynamic_rotate %48 by %c1_i32_16 dim 0 : vector<32x128xf32>, i32 -> vector<32x128xf32>
    %cst_17 = arith.constant 0.000000e+00 : f32
    %50 = vector.broadcast %cst_17 : f32 to vector<32x128xf32>
    %51 = arith.select %7, %49, %50 : vector<32x128xi1>, vector<32x128xf32>
    %52 = arith.truncf %51 : vector<32x128xf32> to vector<32x128xbf16>
    %c31_i32_18 = arith.constant 31 : i32
    %53 = tpu.dynamic_rotate %48 by %c31_i32_18 dim 0 : vector<32x128xf32>, i32 -> vector<32x128xf32>
    %cst_19 = arith.constant 0.000000e+00 : f32
    %54 = vector.broadcast %cst_19 : f32 to vector<32x128xf32>
    %55 = arith.select %9, %53, %54 : vector<32x128xi1>, vector<32x128xf32>
    %56 = arith.truncf %55 : vector<32x128xf32> to vector<32x128xbf16>
    %57 = arith.truncf %48 : vector<32x128xf32> to vector<32x128xbf16>
    %58 = tpu.concatenate %52, %57, %56 in 1 : vector<32x128xbf16>, vector<32x128xbf16>, vector<32x128xbf16> -> vector<32x384xbf16>
    %c0_20 = arith.constant 0 : index
    %c0_21 = arith.constant 0 : index
    %59 = vector.load %arg3[%c0_20, %c0_21] : memref<384x128xbf16, #tpu.memory_space<vmem>>, vector<384x128xbf16>
    %cst_22 = arith.constant dense<0.000000e+00> : vector<32x128xf32>
    %60 = tpu.matmul %58, %59, %cst_22 {dimension_numbers = #tpu.dot_dimension_numbers<[1], [0], [0], [1], [0, 0, 1, 1], [], []>} : vector<32x384xbf16>, vector<384x128xbf16>, vector<32x128xf32> -> vector<32x128xf32>
    %cst_23 = arith.constant dense<0.000000e+00> : vector<128xf32>
    %61 = vector.multi_reduction <add>, %60, %cst_23 [0] : vector<32x128xf32> to vector<128xf32>
    %62 = vector.shape_cast %61 : vector<128xf32> to vector<1x128xf32>
    %63 = arith.mulf %60, %60 : vector<32x128xf32>
    %cst_24 = arith.constant dense<0.000000e+00> : vector<128xf32>
    %64 = vector.multi_reduction <add>, %63, %cst_24 [0] : vector<32x128xf32> to vector<128xf32>
    %65 = vector.shape_cast %64 : vector<128xf32> to vector<1x128xf32>
    %cst_25 = arith.constant 3.125000e-02 : f32
    %66 = vector.broadcast %cst_25 : f32 to vector<1x128xf32>
    %67 = arith.mulf %62, %66 : vector<1x128xf32>
    %cst_26 = arith.constant 3.125000e-02 : f32
    %68 = vector.broadcast %cst_26 : f32 to vector<1x128xf32>
    %69 = arith.mulf %65, %68 : vector<1x128xf32>
    %70 = arith.mulf %67, %67 : vector<1x128xf32>
    %71 = arith.subf %69, %70 : vector<1x128xf32>
    %cst_27 = arith.constant 0.000000e+00 : f32
    %72 = vector.broadcast %cst_27 : f32 to vector<1x128xf32>
    %73 = arith.maximumf %71, %72 : vector<1x128xf32>
    %c0_28 = arith.constant 0 : index
    %c0_29 = arith.constant 0 : index
    %74 = vector.load %arg6[%c0_28, %c0_29] : memref<1x128xf32, #tpu.memory_space<vmem>>, vector<1x128xf32>
    %cst_30 = arith.constant 9.99999974E-6 : f32
    %75 = vector.broadcast %cst_30 : f32 to vector<1x128xf32>
    %76 = arith.addf %73, %75 : vector<1x128xf32>
    %77 = math.rsqrt %76 : vector<1x128xf32>
    %78 = arith.mulf %74, %77 : vector<1x128xf32>
    %c0_31 = arith.constant 0 : index
    %c0_32 = arith.constant 0 : index
    %79 = vector.load %arg7[%c0_31, %c0_32] : memref<1x128xf32, #tpu.memory_space<vmem>>, vector<1x128xf32>
    %80 = arith.mulf %67, %78 : vector<1x128xf32>
    %81 = arith.subf %79, %80 : vector<1x128xf32>
    %82 = vector.broadcast %78 : vector<1x128xf32> to vector<32x128xf32>
    %83 = arith.mulf %60, %82 : vector<32x128xf32>
    %84 = vector.broadcast %81 : vector<1x128xf32> to vector<32x128xf32>
    %85 = arith.addf %83, %84 : vector<32x128xf32>
    %86 = arith.addf %85, %0 : vector<32x128xf32>
    %cst_33 = arith.constant 0.000000e+00 : f32
    %87 = vector.broadcast %cst_33 : f32 to vector<32x128xf32>
    %88 = arith.maximumf %86, %87 : vector<32x128xf32>
    %c0_34 = arith.constant 0 : index
    %c0_35 = arith.constant 0 : index
    %89 = vector.load %arg8[%c0_34, %c0_35] : memref<32x128xf32, #tpu.memory_space<vmem>>, vector<32x128xf32>
    tpu.vector_store %arg8[%c0_34, %c0_35], %88 {strides = array<i32>} : memref<32x128xf32, #tpu.memory_space<vmem>>, vector<32x128xf32>,
    return
  }
  func.func @transform_0(%arg0: i32) -> (i32, i32) {
    %c0_i32 = arith.constant 0 : i32
    %c0_i32_0 = arith.constant 0 : i32
    %c0_i32_1 = arith.constant 0 : i32
    return %c0_i32, %c0_i32_0 : i32, i32
  }
  func.func @transform_1(%arg0: i32) -> (i32, i32) {
    %c0_i32 = arith.constant 0 : i32
    %c0_i32_0 = arith.constant 0 : i32
    %c0_i32_1 = arith.constant 0 : i32
    return %c0_i32, %c0_i32_0 : i32, i32
  }
  func.func @transform_2(%arg0: i32) -> (i32, i32) {
    %c0_i32 = arith.constant 0 : i32
    %c0_i32_0 = arith.constant 0 : i32
    %c0_i32_1 = arith.constant 0 : i32
    return %c0_i32, %c0_i32_0 : i32, i32
  }
  func.func @transform_3(%arg0: i32) -> (i32, i32) {
    %c0_i32 = arith.constant 0 : i32
    %c0_i32_0 = arith.constant 0 : i32
    %c0_i32_1 = arith.constant 0 : i32
    return %c0_i32, %c0_i32_0 : i32, i32
  }
  func.func @transform_4(%arg0: i32) -> (i32, i32) {
    %c0_i32 = arith.constant 0 : i32
    %c0_i32_0 = arith.constant 0 : i32
    %c0_i32_1 = arith.constant 0 : i32
    return %c0_i32, %c0_i32_0 : i32, i32
  }
  func.func @transform_5(%arg0: i32) -> (i32, i32) {
    %c0_i32 = arith.constant 0 : i32
    %c0_i32_0 = arith.constant 0 : i32
    %c0_i32_1 = arith.constant 0 : i32
    return %c0_i32, %c0_i32_0 : i32, i32
  }
  func.func @transform_6(%arg0: i32) -> (i32, i32) {
    %c0_i32 = arith.constant 0 : i32
    %c0_i32_0 = arith.constant 0 : i32
    %c0_i32_1 = arith.constant 0 : i32
    return %c0_i32, %c0_i32_0 : i32, i32
  }
  func.func @transform_7(%arg0: i32) -> (i32, i32) {
    %c0_i32 = arith.constant 0 : i32
    %c0_i32_0 = arith.constant 0 : i32
    %c0_i32_1 = arith.constant 0 : i32
    return %c0_i32, %c0_i32_0 : i32, i32
  }
}

</mosaic_0001>

<llo_original>
// kernel: tpu_custom_call.1
$region0: #{tpu_custom_call.1}
  #allocation0 [shape = 'u32[]', space=smem, size = 0x4, offset = 0x4, fixed_abs, tag = 'smem constant byte address 0x4 - core index']
  #allocation1 [shape = 'u32[144,128]{1,0:T(1,128)}', space=vmem, size = 0x12000, scoped, tag = 'internal scratch']
  %s0 = inlined_call_operand.hbm [shape: f32[32,128], index: 0, kind: input, shape index: {}]
  %s1 = inlined_call_operand.hbm [shape: bf16[384,128], index: 1, kind: input, shape index: {}]
  %s2 = inlined_call_operand.hbm [shape: bf16[384,128], index: 2, kind: input, shape index: {}]
  %s3 = inlined_call_operand.vmem [shape: f32[1,128], index: 3, kind: input, shape index: {}]
  %s4 = inlined_call_operand.vmem [shape: f32[1,128], index: 4, kind: input, shape index: {}]
  %s5 = inlined_call_operand.vmem [shape: f32[1,128], index: 5, kind: input, shape index: {}]
  %s6 = inlined_call_operand.vmem [shape: f32[1,128], index: 6, kind: input, shape index: {}]
  %s7 = inlined_call_operand.hbm [shape: f32[32,128], index: 7, kind: output, shape index: {}]
  %s8 = sld [smem:[#allocation0]]
  $region50: #{tpu_custom_call.1} parent=0
    _
  %s10 = ssub.s32 1, %s8
  %s11 = scalar_select 0, %s10, %s8
  $region1: #{tpu_custom_call.1} parent=0
    #allocation2 [shape = 'u8[16384]{0}', space=vmem, size = 0x4000, scoped, tag = 'input window, operand 0, single buffered']
    #allocation3 [shape = 's32[1]{0}', space=sflag, size = 0x4, scoped, tag = 'scoped memory for tpu_custom_call.1']
    #allocation4 [shape = 's32[1]{0}', space=sflag, size = 0x4, scoped, tag = 'scoped memory for tpu_custom_call.1']
    #allocation5 [shape = 'u8[98304]{0}', space=vmem, size = 0x18000, scoped, tag = 'input window, operand 1, single buffered']
    #allocation6 [shape = 's32[1]{0}', space=sflag, size = 0x4, scoped, tag = 'scoped memory for tpu_custom_call.1']
    #allocation7 [shape = 'u8[98304]{0}', space=vmem, size = 0x18000, scoped, tag = 'input window, operand 2, single buffered']
    #allocation8 [shape = 'u8[16384]{0}', space=vmem, size = 0x4000, scoped, tag = 'output window, operand 0, single buffered']
    %12 = vsyncpa [#allocation3], 0
    %13 = vsyncpa [#allocation6], 0
    %14 = vsyncpa [#allocation4], 0
    // Predicated region
    $region2: #{tpu_custom_call.1} parent=1 // pred_check
      _
    $region3: #{tpu_custom_call.1} parent=1 // pred_check_branch
      %16 = sbr.rel (0) target = $region5
    $region4: #{tpu_custom_call.1} parent=1 // pred_region
      %s18 = ssub.s32 512, 512
      %19 = vsyncadd [#allocation3], %s18
      %s20 = sshll.u32 [#allocation2], 4
      %s21 = int_to_ptr.vmem [resolvable:$true] %s20
      %26 = dma.hbm_to_vmem [thread:$0]  %s0, 512, %s21, [#allocation3], 128, 128, 8
    $region5: #{tpu_custom_call.1} parent=1 // pred_fallthru
      _
    // Predicated region
    $region6: #{tpu_custom_call.1} parent=1 // pred_check
      _
    $region7: #{tpu_custom_call.1} parent=1 // pred_check_branch
      %28 = sbr.rel (0) target = $region9
    $region8: #{tpu_custom_call.1} parent=1 // pred_region
      %s30 = ssub.s32 3072, 3072
      %31 = vsyncadd [#allocation6], %s30
      %s32 = sshll.u32 [#allocation5], 4
      %s33 = int_to_ptr.vmem [resolvable:$true] %s32
      %38 = dma.hbm_to_vmem [thread:$0]  %s1, 3072, %s33, [#allocation6], 64, 64, 4
    $region9: #{tpu_custom_call.1} parent=1 // pred_fallthru
      _
    // Predicated region
    $region10: #{tpu_custom_call.1} parent=1 // pred_check
      _
    $region11: #{tpu_custom_call.1} parent=1 // pred_check_branch
      %40 = sbr.rel (0) target = $region13
    $region12: #{tpu_custom_call.1} parent=1 // pred_region
      %s42 = ssub.s32 3072, 3072
      %43 = vsyncadd [#allocation6], %s42
      %s44 = sshll.u32 [#allocation7], 4
      %s45 = int_to_ptr.vmem [resolvable:$true] %s44
      %50 = dma.hbm_to_vmem [thread:$0]  %s2, 3072, %s45, [#allocation6], 64, 64, 4
    $region13: #{tpu_custom_call.1} parent=1 // pred_fallthru
      _
    // Predicated region
    $region14: #{tpu_custom_call.1} parent=1 // pred_check
      _
    $region15: #{tpu_custom_call.1} parent=1 // pred_check_branch
      %52 = sbr.rel (0) target = $region17
    $region16: #{tpu_custom_call.1} parent=1 // pred_region
      _
    $region17: #{tpu_custom_call.1} parent=1 // pred_fallthru
      _
    // Predicated region
    $region18: #{tpu_custom_call.1} parent=1 // pred_check
      _
    $region19: #{tpu_custom_call.1} parent=1 // pred_check_branch
      %54 = sbr.rel (0) target = $region21
    $region20: #{tpu_custom_call.1} parent=1 // pred_region
      _
    $region21: #{tpu_custom_call.1} parent=1 // pred_fallthru
      _
    // Predicated region
    $region22: #{tpu_custom_call.1} parent=1 // pred_check
      _
    $region23: #{tpu_custom_call.1} parent=1 // pred_check_branch
      %56 = sbr.rel (0) target = $region25
    $region24: #{tpu_custom_call.1} parent=1 // pred_region
      _
    $region25: #{tpu_custom_call.1} parent=1 // pred_fallthru
      _
    // Predicated region
    $region26: #{tpu_custom_call.1} parent=1 // pred_check
      _
    $region27: #{tpu_custom_call.1} parent=1 // pred_check_branch
      %58 = sbr.rel (0) target = $region29
    $region28: #{tpu_custom_call.1} parent=1 // pred_region
      _
    $region29: #{tpu_custom_call.1} parent=1 // pred_fallthru
      _
    // Predicated region
    $region30: #{tpu_custom_call.1} parent=1 // pred_check
      _
    $region31: #{tpu_custom_call.1} parent=1 // pred_check_branch
      %60 = sbr.rel (0) target = $region33
    $region32: #{tpu_custom_call.1} parent=1 // pred_region
      %61 = dma.done [#allocation3], 512
    $region33: #{tpu_custom_call.1} parent=1 // pred_fallthru
      _
    // Predicated region
    $region34: #{tpu_custom_call.1} parent=1 // pred_check
      _
    $region35: #{tpu_custom_call.1} parent=1 // pred_check_branch
      %63 = sbr.rel (0) target = $region37
    $region36: #{tpu_custom_call.1} parent=1 // pred_region
      %64 = dma.done [#allocation6], 3072
    $region37: #{tpu_custom_call.1} parent=1 // pred_fallthru
      _
    // Predicated region
    $region38: #{tpu_custom_call.1} parent=1 // pred_check
      _
    $region39: #{tpu_custom_call.1} parent=1 // pred_check_branch
      %66 = sbr.rel (0) target = $region41
    $region40: #{tpu_custom_call.1} parent=1 // pred_region
      %67 = dma.done [#allocation6], 3072
    $region41: #{tpu_custom_call.1} parent=1 // pred_fallthru
      _
    %v69 = vld [vmem:[#allocation2] sm:$0xff]
    %v70 = vld [vmem:[#allocation2 + $0x8] sm:$0xff]
    %v71 = vld [vmem:[#allocation2 + $0x10] sm:$0xff]
    %v72 = vld [vmem:[#allocation2 + $0x18] sm:$0xff]
    %v73 = vlaneseq
    %v74 = vshrl.u32 %v73, 7
    %v75 = vadd.s32 %v74, 8
    %vm76 = vcmp.gt.s32.totalorder %v74, 0
    %vm77 = vcmp.gt.s32.totalorder %v75, 0
    %vm78 = vcmp.lt.s32.totalorder %v74, 16
    %vm79 = vcmp.lt.s32.totalorder %v75, 16
    %vm80 = vmand %vm76, %vm78
    %vm81 = vmand %vm77, %vm79
    %vm82 = vcmp.lt.s32.totalorder %v74, 15
    %vm83 = vcmp.lt.s32.totalorder %v75, 15
    %v84 = vrot.slane %v69, 7
    %v85 = vrot.slane %v70, 7
    %v86 = vrot.slane %v71, 7
    %v87 = vrot.slane %v72, 7
    %vm88 = vcmp.lt.s32.totalorder %v74, 1
    %v89 = vsel %vm88, %v86, %v87
    %v90 = vsel %vm88, %v85, %v86
    %v91 = vsel %vm88, %v84, %v85
    %v92 = vsel %vm88, %v87, %v84
    %v93 = vsel %vm80, %v92, 0.0
    %v94 = vsel %vm81, %v91, 0.0
    %v95 = vsel %vm80, %v90, 0.0
    %v96 = vsel %vm81, %v89, 0.0
    %v97 = vpack.c.bf16 %v94, %v93
    %v98 = vpack.c.bf16 %v96, %v95
    %v99 = vrot.slane %v69, 1
    %v100 = vrot.slane %v70, 1
    %v101 = vrot.slane %v71, 1
    %v102 = vrot.slane %v72, 1
    %vm103 = vcmp.lt.s32.totalorder %v74, 7
    %v104 = vsel %vm103, %v101, %v102
    %v105 = vsel %vm103, %v100, %v101
    %v106 = vsel %vm103, %v99, %v100
    %v107 = vsel %vm103, %v102, %v99
    %v108 = vsel %vm82, %v106, 0.0
    %v109 = vsel %vm83, %v105, 0.0
    %v110 = vsel %vm82, %v104, 0.0
    %v111 = vsel %vm83, %v107, 0.0
    %v112 = vpack.c.bf16 %v109, %v108
    %v113 = vpack.c.bf16 %v111, %v110
    %v114 = vpack.c.bf16 %v70, %v69
    %v115 = vpack.c.bf16 %v72, %v71
    %v116 = vld [vmem:[#allocation5] sm:$0xf]
    %v117 = vld [vmem:[#allocation5 + $0x4] sm:$0xf]
    %v118 = vld [vmem:[#allocation5 + $0x8] sm:$0xf]
    %v119 = vld [vmem:[#allocation5 + $0xc] sm:$0xf]
    %v120 = vld [vmem:[#allocation5 + $0x10] sm:$0xf]
    %v121 = vld [vmem:[#allocation5 + $0x14] sm:$0xf]
    %v122 = vld [vmem:[#allocation5 + $0x18] sm:$0xf]
    %v123 = vld [vmem:[#allocation5 + $0x1c] sm:$0xf]
    %v124 = vld [vmem:[#allocation5 + $0x20] sm:$0xf]
    %v125 = vld [vmem:[#allocation5 + $0x24] sm:$0xf]
    %v126 = vld [vmem:[#allocation5 + $0x28] sm:$0xf]
    %v127 = vld [vmem:[#allocation5 + $0x2c] sm:$0xf]
    %v128 = vld [vmem:[#allocation5 + $0x30] sm:$0xf]
    %v129 = vld [vmem:[#allocation5 + $0x34] sm:$0xf]
    %v130 = vld [vmem:[#allocation5 + $0x38] sm:$0xf]
    %v131 = vld [vmem:[#allocation5 + $0x3c] sm:$0xf]
    %v132 = vld [vmem:[#allocation5 + $0x40] sm:$0xf]
    %v133 = vld [vmem:[#allocation5 + $0x44] sm:$0xf]
    %v134 = vld [vmem:[#allocation5 + $0x48] sm:$0xf]
    %v135 = vld [vmem:[#allocation5 + $0x4c] sm:$0xf]
    %v136 = vld [vmem:[#allocation5 + $0x50] sm:$0xf]
    %v137 = vld [vmem:[#allocation5 + $0x54] sm:$0xf]
    %v138 = vld [vmem:[#allocation5 + $0x58] sm:$0xf]
    %v139 = vld [vmem:[#allocation5 + $0x5c] sm:$0xf]
    %v140 = vld [vmem:[#allocation5 + $0x60] sm:$0xf]
    %v141 = vld [vmem:[#allocation5 + $0x64] sm:$0xf]
    %v142 = vld [vmem:[#allocation5 + $0x68] sm:$0xf]
    %v143 = vld [vmem:[#allocation5 + $0x6c] sm:$0xf]
    %v144 = vld [vmem:[#allocation5 + $0x70] sm:$0xf]
    %v145 = vld [vmem:[#allocation5 + $0x74] sm:$0xf]
    %v146 = vld [vmem:[#allocation5 + $0x78] sm:$0xf]
    %v147 = vld [vmem:[#allocation5 + $0x7c] sm:$0xf]
    %v148 = vld [vmem:[#allocation5 + $0x80] sm:$0xf]
    %v149 = vld [vmem:[#allocation5 + $0x84] sm:$0xf]
    %v150 = vld [vmem:[#allocation5 + $0x88] sm:$0xf]
    %v151 = vld [vmem:[#allocation5 + $0x8c] sm:$0xf]
    %v152 = vld [vmem:[#allocation5 + $0x90] sm:$0xf]
    %v153 = vld [vmem:[#allocation5 + $0x94] sm:$0xf]
    %v154 = vld [vmem:[#allocation5 + $0x98] sm:$0xf]
    %v155 = vld [vmem:[#allocation5 + $0x9c] sm:$0xf]
    %v156 = vld [vmem:[#allocation5 + $0xa0] sm:$0xf]
    %v157 = vld [vmem:[#allocation5 + $0xa4] sm:$0xf]
    %v158 = vld [vmem:[#allocation5 + $0xa8] sm:$0xf]
    %v159 = vld [vmem:[#allocation5 + $0xac] sm:$0xf]
    %v160 = vld [vmem:[#allocation5 + $0xb0] sm:$0xf]
    %v161 = vld [vmem:[#allocation5 + $0xb4] sm:$0xf]
    %v162 = vld [vmem:[#allocation5 + $0xb8] sm:$0xf]
    %v163 = vld [vmem:[#allocation5 + $0xbc] sm:$0xf]
    %v212 = vunpack.c.l.b16 %v116
    %v213 = vunpack.c.l.b16 %v117
    %v214 = vunpack.c.l.b16 %v118
    %v215 = vunpack.c.l.b16 %v119
    %v216 = vunpack.c.l.b16 %v120
    %v217 = vunpack.c.l.b16 %v121
    %v218 = vunpack.c.l.b16 %v122
    %v219 = vunpack.c.l.b16 %v123
    %v220 = vunpack.c.l.b16 %v124
    %v221 = vunpack.c.l.b16 %v125
    %v222 = vunpack.c.l.b16 %v126
    %v223 = vunpack.c.l.b16 %v127
    %v224 = vunpack.c.l.b16 %v128
    %v225 = vunpack.c.l.b16 %v129
    %v226 = vunpack.c.l.b16 %v130
    %v227 = vunpack.c.l.b16 %v131
    %v228 = vunpack.c.l.b16 %v132
    %v229 = vunpack.c.l.b16 %v133
    %v230 = vunpack.c.l.b16 %v134
    %v231 = vunpack.c.l.b16 %v135
    %v232 = vunpack.c.l.b16 %v136
    %v233 = vunpack.c.l.b16 %v137
    %v234 = vunpack.c.l.b16 %v138
    %v235 = vunpack.c.l.b16 %v139
    %v236 = vunpack.c.l.b16 %v140
    %v237 = vunpack.c.l.b16 %v141
    %v238 = vunpack.c.l.b16 %v142
    %v239 = vunpack.c.l.b16 %v143
    %v240 = vunpack.c.l.b16 %v144
    %v241 = vunpack.c.l.b16 %v145
    %v242 = vunpack.c.l.b16 %v146
    %v243 = vunpack.c.l.b16 %v147
    %v244 = vunpack.c.l.b16 %v148
    %v245 = vunpack.c.l.b16 %v149
    %v246 = vunpack.c.l.b16 %v150
    %v247 = vunpack.c.l.b16 %v151
    %v248 = vunpack.c.l.b16 %v152
    %v249 = vunpack.c.l.b16 %v153
    %v250 = vunpack.c.l.b16 %v154
    %v251 = vunpack.c.l.b16 %v155
    %v252 = vunpack.c.l.b16 %v156
    %v253 = vunpack.c.l.b16 %v157
    %v254 = vunpack.c.l.b16 %v158
    %v255 = vunpack.c.l.b16 %v159
    %v256 = vunpack.c.l.b16 %v160
    %v257 = vunpack.c.l.b16 %v161
    %v258 = vunpack.c.l.b16 %v162
    %v259 = vunpack.c.l.b16 %v163
    %v260 = vpack.c.b16 %v213, %v212
    %v261 = vpack.c.b16 %v215, %v214
    %v262 = vpack.c.b16 %v217, %v216
    %v263 = vpack.c.b16 %v219, %v218
    %v264 = vpack.c.b16 %v221, %v220
    %v265 = vpack.c.b16 %v223, %v222
    %v266 = vpack.c.b16 %v225, %v224
    %v267 = vpack.c.b16 %v227, %v226
    %v268 = vpack.c.b16 %v229, %v228
    %v269 = vpack.c.b16 %v231, %v230
    %v270 = vpack.c.b16 %v233, %v232
    %v271 = vpack.c.b16 %v235, %v234
    %v272 = vpack.c.b16 %v237, %v236
    %v273 = vpack.c.b16 %v239, %v238
    %v274 = vpack.c.b16 %v241, %v240
    %v275 = vpack.c.b16 %v243, %v242
    %v276 = vpack.c.b16 %v245, %v244
    %v277 = vpack.c.b16 %v247, %v246
    %v278 = vpack.c.b16 %v249, %v248
    %v279 = vpack.c.b16 %v251, %v250
    %v280 = vpack.c.b16 %v253, %v252
    %v281 = vpack.c.b16 %v255, %v254
    %v282 = vpack.c.b16 %v257, %v256
    %v283 = vpack.c.b16 %v259, %v258
    %308 = vmatprep.subr.bf16.mxu0 0
    %309 = vmatpush1.bf16.msra.mxu0 %v267
    %310 = vmatprep.subr.bf16.mxu0 0
    %311 = vmatpush1.bf16.msra.mxu0 %v266
    %312 = vmatprep.subr.bf16.mxu0 0
    %313 = vmatpush1.bf16.msra.mxu0 %v265
    %314 = vmatprep.subr.bf16.mxu0 0
    %315 = vmatpush1.bf16.msra.mxu0 %v264
    %316 = vmatprep.subr.bf16.mxu0 0
    %317 = vmatpush1.bf16.msra.mxu0 %v263
    %318 = vmatprep.subr.bf16.mxu0 0
    %319 = vmatpush1.bf16.msra.mxu0 %v262
    %320 = vmatprep.subr.bf16.mxu0 0
    %321 = vmatpush1.bf16.msra.mxu0 %v261
    %322 = vmatprep.subr.bf16.mxu0 0
    %323 = vmatpush1.bf16.msra.mxu0 %v260
    %324 = vmatprep.subr.bf16.mxu0 0
    %325 = vmatpush2.bf16.msra.mxu0 %v275
    %326 = vmatprep.subr.bf16.mxu0 0
    %327 = vmatpush2.bf16.msra.mxu0 %v274
    %328 = vmatprep.subr.bf16.mxu0 0
    %329 = vmatpush2.bf16.msra.mxu0 %v273
    %330 = vmatprep.subr.bf16.mxu0 0
    %331 = vmatpush2.bf16.msra.mxu0 %v272
    %332 = vmatprep.subr.bf16.mxu0 0
    %333 = vmatpush2.bf16.msra.mxu0 %v271
    %334 = vmatprep.subr.bf16.mxu0 0
    %335 = vmatpush2.bf16.msra.mxu0 %v270
    %336 = vmatprep.subr.bf16.mxu0 0
    %337 = vmatpush2.bf16.msra.mxu0 %v269
    %338 = vmatprep.subr.bf16.mxu0 0
    %339 = vmatpush2.bf16.msra.mxu0 %v268
    %340 = vmatprep.mubr.bf16.mxu0 %v114
    %341 = vmatmul.mubr.bf16.gmra.mxu0 %v97
    %v342 = vpop.f32.mrf.mxu0
    %v343 = vadd.f32 0.0, %v342
    %v344 = vpop.f32.mrf.mxu0
    %v345 = vpop.f32.mrf.mxu0
    %v346 = vadd.f32 0.0, %v345
    %v347 = vpop.f32.mrf.mxu0
    %348 = vmatprep.mubr.bf16.mxu0 %v115
    %349 = vmatmul.mubr.bf16.gmra.mxu0 %v98
    %v350 = vpop.f32.mrf.mxu0
    %v351 = vadd.f32 0.0, %v350
    %v352 = vpop.f32.mrf.mxu0
    %v353 = vpop.f32.mrf.mxu0
    %v354 = vadd.f32 0.0, %v353
    %v355 = vpop.f32.mrf.mxu0
    %356 = vdwg.mxu0
    %357 = vmatprep.subr.bf16.mxu0 0
    %358 = vmatpush1.bf16.msra.mxu0 %v283
    %359 = vmatprep.subr.bf16.mxu0 0
    %360 = vmatpush1.bf16.msra.mxu0 %v282
    %361 = vmatprep.subr.bf16.mxu0 0
    %362 = vmatpush1.bf16.msra.mxu0 %v281
    %363 = vmatprep.subr.bf16.mxu0 0
    %364 = vmatpush1.bf16.msra.mxu0 %v280
    %365 = vmatprep.subr.bf16.mxu0 0
    %366 = vmatpush1.bf16.msra.mxu0 %v279
    %367 = vmatprep.subr.bf16.mxu0 0
    %368 = vmatpush1.bf16.msra.mxu0 %v278
    %369 = vmatprep.subr.bf16.mxu0 0
    %370 = vmatpush1.bf16.msra.mxu0 %v277
    %371 = vmatprep.subr.bf16.mxu0 0
    %372 = vmatpush1.bf16.msra.mxu0 %v276
    %373 = vmatprep.subr.bf16.mxu0 0
    %374 = vmatpush2.bf16.msra.mxu0 0
    %375 = vmatprep.subr.bf16.mxu0 0
    %376 = vmatpush2.bf16.msra.mxu0 0
    %377 = vmatprep.subr.bf16.mxu0 0
    %378 = vmatpush2.bf16.msra.mxu0 0
    %379 = vmatprep.subr.bf16.mxu0 0
    %380 = vmatpush2.bf16.msra.mxu0 0
    %381 = vmatprep.subr.bf16.mxu0 0
    %382 = vmatpush2.bf16.msra.mxu0 0
    %383 = vmatprep.subr.bf16.mxu0 0
    %384 = vmatpush2.bf16.msra.mxu0 0
    %385 = vmatprep.subr.bf16.mxu0 0
    %386 = vmatpush2.bf16.msra.mxu0 0
    %387 = vmatprep.subr.bf16.mxu0 0
    %388 = vmatpush2.bf16.msra.mxu0 0
    %389 = vmatprep.mubr.bf16.mxu0 0
    %390 = vmatmul.mubr.bf16.gmra.mxu0 %v112
    %v391 = vpop.f32.mrf.mxu0
    %v392 = vadd.f32 %v343, %v391
    %v393 = vpop.f32.mrf.mxu0
    %v394 = vpop.f32.mrf.mxu0
    %v395 = vadd.f32 %v346, %v394
    %v396 = vpop.f32.mrf.mxu0
    %397 = vmatprep.mubr.bf16.mxu0 0
    %398 = vmatmul.mubr.bf16.gmra.mxu0 %v113
    %v399 = vpop.f32.mrf.mxu0
    %v400 = vadd.f32 %v351, %v399
    %v401 = vpop.f32.mrf.mxu0
    %v402 = vpop.f32.mrf.mxu0
    %v403 = vadd.f32 %v354, %v402
    %v404 = vpop.f32.mrf.mxu0
    %405 = vdwg.mxu0
    %v406 = vadd.f32 %v392, %v395
    %v407 = vadd.f32 %v406, %v400
    %v408 = vadd.f32 %v407, %v403
    %v409 = vrot.slane %v408, 4
    %v410 = vadd.f32 %v408, %v409
    %v411 = vrot.slane %v410, 2
    %v412 = vadd.f32 %v410, %v411
    %v413 = vrot.slane %v412, 1
    %v414 = vadd.f32 %v412, %v413
    %v415 = vmul.f32 %v392, %v392
    %v416 = vmul.f32 %v395, %v395
    %v417 = vmul.f32 %v400, %v400
    %v418 = vmul.f32 %v403, %v403
    %v419 = vadd.f32 %v415, %v416
    %v420 = vadd.f32 %v419, %v417
    %v421 = vadd.f32 %v420, %v418
    %v422 = vrot.slane %v421, 4
    %v423 = vadd.f32 %v421, %v422
    %v424 = vrot.slane %v423, 2
    %v425 = vadd.f32 %v423, %v424
    %v426 = vrot.slane %v425, 1
    %v427 = vadd.f32 %v425, %v426
    %v428 = vmul.f32 %v414, 0.03125
    %v429 = vmul.f32 %v427, 0.03125
    %v430 = vmul.f32 %v428, %v428
    %v431 = vsub.f32 %v429, %v430
    %v432 = vmax.f32 %v431, 0.0
    %v433 = vld [vmem:[%s3] sm:$0x1]
    %v434 = vadd.f32 %v432, 1e-05
    %v435 = vrsqrt.pop %v434
    %v436 = vmul.f32 %v433, %v435
    %v437 = vld [vmem:[%s4] sm:$0x1]
    %v438 = vmul.f32 %v428, %v436
    %v439 = vsub.f32 %v437, %v438
    %v441 = vlaneseq
    %v442 = vshrl.u32 %v441, 7
    %v443 = vsub.s32 0, %v442
    %v444 = vrot.slane %v436, %v443
    %v446 = vmul.f32 %v392, %v444
    %v447 = vmul.f32 %v395, %v444
    %v448 = vmul.f32 %v400, %v444
    %v449 = vmul.f32 %v403, %v444
    %v451 = vlaneseq
    %v452 = vshrl.u32 %v451, 7
    %v453 = vsub.s32 0, %v452
    %v454 = vrot.slane %v439, %v453
    %v456 = vadd.f32 %v446, %v454
    %v457 = vadd.f32 %v447, %v454
    %v458 = vadd.f32 %v448, %v454
    %v459 = vadd.f32 %v449, %v454
    %v460 = vmax.f32 %v456, 0.0
    %v461 = vmax.f32 %v457, 0.0
    %v462 = vmax.f32 %v458, 0.0
    %v463 = vmax.f32 %v459, 0.0
    %v464 = vrot.slane %v460, 7
    %v465 = vrot.slane %v461, 7
    %v466 = vrot.slane %v462, 7
    %v467 = vrot.slane %v463, 7
    %v468 = vsel %vm88, %v466, %v467
    %v469 = vsel %vm88, %v465, %v466
    %v470 = vsel %vm88, %v464, %v465
    %v471 = vsel %vm88, %v467, %v464
    %v472 = vsel %vm80, %v471, 0.0
    %v473 = vsel %vm81, %v470, 0.0
    %v474 = vsel %vm80, %v469, 0.0
    %v475 = vsel %vm81, %v468, 0.0
    %v476 = vpack.c.bf16 %v473, %v472
    %v477 = vpack.c.bf16 %v475, %v474
    %v478 = vrot.slane %v460, 1
    %v479 = vrot.slane %v461, 1
    %v480 = vrot.slane %v462, 1
    %v481 = vrot.slane %v463, 1
    %v482 = vsel %vm103, %v480, %v481
    %v483 = vsel %vm103, %v479, %v480
    %v484 = vsel %vm103, %v478, %v479
    %v485 = vsel %vm103, %v481, %v478
    %v486 = vsel %vm82, %v484, 0.0
    %v487 = vsel %vm83, %v483, 0.0
    %v488 = vsel %vm82, %v482, 0.0
    %v489 = vsel %vm83, %v485, 0.0
    %v490 = vpack.c.bf16 %v487, %v486
    %v491 = vpack.c.bf16 %v489, %v488
    %v492 = vpack.c.bf16 %v461, %v460
    %v493 = vpack.c.bf16 %v463, %v462
    %v494 = vld [vmem:[#allocation7] sm:$0xf]
    %v495 = vld [vmem:[#allocation7 + $0x4] sm:$0xf]
    %v496 = vld [vmem:[#allocation7 + $0x8] sm:$0xf]
    %v497 = vld [vmem:[#allocation7 + $0xc] sm:$0xf]
    %v498 = vld [vmem:[#allocation7 + $0x10] sm:$0xf]
    %v499 = vld [vmem:[#allocation7 + $0x14] sm:$0xf]
    %v500 = vld [vmem:[#allocation7 + $0x18] sm:$0xf]
    %v501 = vld [vmem:[#allocation7 + $0x1c] sm:$0xf]
    %v502 = vld [vmem:[#allocation7 + $0x20] sm:$0xf]
    %v503 = vld [vmem:[#allocation7 + $0x24] sm:$0xf]
    %v504 = vld [vmem:[#allocation7 + $0x28] sm:$0xf]
    %v505 = vld [vmem:[#allocation7 + $0x2c] sm:$0xf]
    %v506 = vld [vmem:[#allocation7 + $0x30] sm:$0xf]
    %v507 = vld [vmem:[#allocation7 + $0x34] sm:$0xf]
    %v508 = vld [vmem:[#allocation7 + $0x38] sm:$0xf]
    %v509 = vld [vmem:[#allocation7 + $0x3c] sm:$0xf]
    %v510 = vld [vmem:[#allocation7 + $0x40] sm:$0xf]
    %v511 = vld [vmem:[#allocation7 + $0x44] sm:$0xf]
    %v512 = vld [vmem:[#allocation7 + $0x48] sm:$0xf]
    %v513 = vld [vmem:[#allocation7 + $0x4c] sm:$0xf]
    %v514 = vld [vmem:[#allocation7 + $0x50] sm:$0xf]
    %v515 = vld [vmem:[#allocation7 + $0x54] sm:$0xf]
    %v516 = vld [vmem:[#allocation7 + $0x58] sm:$0xf]
    %v517 = vld [vmem:[#allocation7 + $0x5c] sm:$0xf]
    %v518 = vld [vmem:[#allocation7 + $0x60] sm:$0xf]
    %v519 = vld [vmem:[#allocation7 + $0x64] sm:$0xf]
    %v520 = vld [vmem:[#allocation7 + $0x68] sm:$0xf]
    %v521 = vld [vmem:[#allocation7 + $0x6c] sm:$0xf]
    %v522 = vld [vmem:[#allocation7 + $0x70] sm:$0xf]
    %v523 = vld [vmem:[#allocation7 + $0x74] sm:$0xf]
    %v524 = vld [vmem:[#allocation7 + $0x78] sm:$0xf]
    %v525 = vld [vmem:[#allocation7 + $0x7c] sm:$0xf]
    %v526 = vld [vmem:[#allocation7 + $0x80] sm:$0xf]
    %v527 = vld [vmem:[#allocation7 + $0x84] sm:$0xf]
    %v528 = vld [vmem:[#allocation7 + $0x88] sm:$0xf]
    %v529 = vld [vmem:[#allocation7 + $0x8c] sm:$0xf]
    %v530 = vld [vmem:[#allocation7 + $0x90] sm:$0xf]
    %v531 = vld [vmem:[#allocation7 + $0x94] sm:$0xf]
    %v532 = vld [vmem:[#allocation7 + $0x98] sm:$0xf]
    %v533 = vld [vmem:[#allocation7 + $0x9c] sm:$0xf]
    %v534 = vld [vmem:[#allocation7 + $0xa0] sm:$0xf]
    %v535 = vld [vmem:[#allocation7 + $0xa4] sm:$0xf]
    %v536 = vld [vmem:[#allocation7 + $0xa8] sm:$0xf]
    %v537 = vld [vmem:[#allocation7 + $0xac] sm:$0xf]
    %v538 = vld [vmem:[#allocation7 + $0xb0] sm:$0xf]
    %v539 = vld [vmem:[#allocation7 + $0xb4] sm:$0xf]
    %v540 = vld [vmem:[#allocation7 + $0xb8] sm:$0xf]
    %v541 = vld [vmem:[#allocation7 + $0xbc] sm:$0xf]
    %v590 = vunpack.c.l.b16 %v494
    %v591 = vunpack.c.l.b16 %v495
    %v592 = vunpack.c.l.b16 %v496
    %v593 = vunpack.c.l.b16 %v497
    %v594 = vunpack.c.l.b16 %v498
    %v595 = vunpack.c.l.b16 %v499
    %v596 = vunpack.c.l.b16 %v500
    %v597 = vunpack.c.l.b16 %v501
    %v598 = vunpack.c.l.b16 %v502
    %v599 = vunpack.c.l.b16 %v503
    %v600 = vunpack.c.l.b16 %v504
    %v601 = vunpack.c.l.b16 %v505
    %v602 = vunpack.c.l.b16 %v506
    %v603 = vunpack.c.l.b16 %v507
    %v604 = vunpack.c.l.b16 %v508
    %v605 = vunpack.c.l.b16 %v509
    %v606 = vunpack.c.l.b16 %v510
    %v607 = vunpack.c.l.b16 %v511
    %v608 = vunpack.c.l.b16 %v512
    %v609 = vunpack.c.l.b16 %v513
    %v610 = vunpack.c.l.b16 %v514
    %v611 = vunpack.c.l.b16 %v515
    %v612 = vunpack.c.l.b16 %v516
    %v613 = vunpack.c.l.b16 %v517
    %v614 = vunpack.c.l.b16 %v518
    %v615 = vunpack.c.l.b16 %v519
    %v616 = vunpack.c.l.b16 %v520
    %v617 = vunpack.c.l.b16 %v521
    %v618 = vunpack.c.l.b16 %v522
    %v619 = vunpack.c.l.b16 %v523
    %v620 = vunpack.c.l.b16 %v524
    %v621 = vunpack.c.l.b16 %v525
    %v622 = vunpack.c.l.b16 %v526
    %v623 = vunpack.c.l.b16 %v527
    %v624 = vunpack.c.l.b16 %v528
    %v625 = vunpack.c.l.b16 %v529
    %v626 = vunpack.c.l.b16 %v530
    %v627 = vunpack.c.l.b16 %v531
    %v628 = vunpack.c.l.b16 %v532
    %v629 = vunpack.c.l.b16 %v533
    %v630 = vunpack.c.l.b16 %v534
    %v631 = vunpack.c.l.b16 %v535
    %v632 = vunpack.c.l.b16 %v536
    %v633 = vunpack.c.l.b16 %v537
    %v634 = vunpack.c.l.b16 %v538
    %v635 = vunpack.c.l.b16 %v539
    %v636 = vunpack.c.l.b16 %v540
    %v637 = vunpack.c.l.b16 %v541
    %v638 = vpack.c.b16 %v591, %v590
    %v639 = vpack.c.b16 %v593, %v592
    %v640 = vpack.c.b16 %v595, %v594
    %v641 = vpack.c.b16 %v597, %v596
    %v642 = vpack.c.b16 %v599, %v598
    %v643 = vpack.c.b16 %v601, %v600
    %v644 = vpack.c.b16 %v603, %v602
    %v645 = vpack.c.b16 %v605, %v604
    %v646 = vpack.c.b16 %v607, %v606
    %v647 = vpack.c.b16 %v609, %v608
    %v648 = vpack.c.b16 %v611, %v610
    %v649 = vpack.c.b16 %v613, %v612
    %v650 = vpack.c.b16 %v615, %v614
    %v651 = vpack.c.b16 %v617, %v616
    %v652 = vpack.c.b16 %v619, %v618
    %v653 = vpack.c.b16 %v621, %v620
    %v654 = vpack.c.b16 %v623, %v622
    %v655 = vpack.c.b16 %v625, %v624
    %v656 = vpack.c.b16 %v627, %v626
    %v657 = vpack.c.b16 %v629, %v628
    %v658 = vpack.c.b16 %v631, %v630
    %v659 = vpack.c.b16 %v633, %v632
    %v660 = vpack.c.b16 %v635, %v634
    %v661 = vpack.c.b16 %v637, %v636
    %686 = vmatprep.subr.bf16.mxu0 0
    %687 = vmatpush1.bf16.msra.mxu0 %v645
    %688 = vmatprep.subr.bf16.mxu0 0
    %689 = vmatpush1.bf16.msra.mxu0 %v644
    %690 = vmatprep.subr.bf16.mxu0 0
    %691 = vmatpush1.bf16.msra.mxu0 %v643
    %692 = vmatprep.subr.bf16.mxu0 0
    %693 = vmatpush1.bf16.msra.mxu0 %v642
    %694 = vmatprep.subr.bf16.mxu0 0
    %695 = vmatpush1.bf16.msra.mxu0 %v641
    %696 = vmatprep.subr.bf16.mxu0 0
    %697 = vmatpush1.bf16.msra.mxu0 %v640
    %698 = vmatprep.subr.bf16.mxu0 0
    %699 = vmatpush1.bf16.msra.mxu0 %v639
    %700 = vmatprep.subr.bf16.mxu0 0
    %701 = vmatpush1.bf16.msra.mxu0 %v638
    %702 = vmatprep.subr.bf16.mxu0 0
    %703 = vmatpush2.bf16.msra.mxu0 %v653
    %704 = vmatprep.subr.bf16.mxu0 0
    %705 = vmatpush2.bf16.msra.mxu0 %v652
    %706 = vmatprep.subr.bf16.mxu0 0
    %707 = vmatpush2.bf16.msra.mxu0 %v651
    %708 = vmatprep.subr.bf16.mxu0 0
    %709 = vmatpush2.bf16.msra.mxu0 %v650
    %710 = vmatprep.subr.bf16.mxu0 0
    %711 = vmatpush2.bf16.msra.mxu0 %v649
    %712 = vmatprep.subr.bf16.mxu0 0
    %713 = vmatpush2.bf16.msra.mxu0 %v648
    %714 = vmatprep.subr.bf16.mxu0 0
    %715 = vmatpush2.bf16.msra.mxu0 %v647
    %716 = vmatprep.subr.bf16.mxu0 0
    %717 = vmatpush2.bf16.msra.mxu0 %v646
    %718 = vmatprep.mubr.bf16.mxu0 %v492
    %719 = vmatmul.mubr.bf16.gmra.mxu0 %v476
    %v720 = vpop.f32.mrf.mxu0
    %v721 = vadd.f32 0.0, %v720
    %v722 = vpop.f32.mrf.mxu0
    %v723 = vpop.f32.mrf.mxu0
    %v724 = vadd.f32 0.0, %v723
    %v725 = vpop.f32.mrf.mxu0
    %726 = vmatprep.mubr.bf16.mxu0 %v493
    %727 = vmatmul.mubr.bf16.gmra.mxu0 %v477
    %v728 = vpop.f32.mrf.mxu0
    %v729 = vadd.f32 0.0, %v728
    %v730 = vpop.f32.mrf.mxu0
    %v731 = vpop.f32.mrf.mxu0
    %v732 = vadd.f32 0.0, %v731
    %v733 = vpop.f32.mrf.mxu0
    %734 = vdwg.mxu0
    %735 = vmatprep.subr.bf16.mxu0 0
    %736 = vmatpush1.bf16.msra.mxu0 %v661
    %737 = vmatprep.subr.bf16.mxu0 0
    %738 = vmatpush1.bf16.msra.mxu0 %v660
    %739 = vmatprep.subr.bf16.mxu0 0
    %740 = vmatpush1.bf16.msra.mxu0 %v659
    %741 = vmatprep.subr.bf16.mxu0 0
    %742 = vmatpush1.bf16.msra.mxu0 %v658
    %743 = vmatprep.subr.bf16.mxu0 0
    %744 = vmatpush1.bf16.msra.mxu0 %v657
    %745 = vmatprep.subr.bf16.mxu0 0
    %746 = vmatpush1.bf16.msra.mxu0 %v656
    %747 = vmatprep.subr.bf16.mxu0 0
    %748 = vmatpush1.bf16.msra.mxu0 %v655
    %749 = vmatprep.subr.bf16.mxu0 0
    %750 = vmatpush1.bf16.msra.mxu0 %v654
    %751 = vmatprep.subr.bf16.mxu0 0
    %752 = vmatpush2.bf16.msra.mxu0 0
    %753 = vmatprep.subr.bf16.mxu0 0
    %754 = vmatpush2.bf16.msra.mxu0 0
    %755 = vmatprep.subr.bf16.mxu0 0
    %756 = vmatpush2.bf16.msra.mxu0 0
    %757 = vmatprep.subr.bf16.mxu0 0
    %758 = vmatpush2.bf16.msra.mxu0 0
    %759 = vmatprep.subr.bf16.mxu0 0
    %760 = vmatpush2.bf16.msra.mxu0 0
    %761 = vmatprep.subr.bf16.mxu0 0
    %762 = vmatpush2.bf16.msra.mxu0 0
    %763 = vmatprep.subr.bf16.mxu0 0
    %764 = vmatpush2.bf16.msra.mxu0 0
    %765 = vmatprep.subr.bf16.mxu0 0
    %766 = vmatpush2.bf16.msra.mxu0 0
    %767 = vmatprep.mubr.bf16.mxu0 0
    %768 = vmatmul.mubr.bf16.gmra.mxu0 %v490
    %v769 = vpop.f32.mrf.mxu0
    %v770 = vadd.f32 %v721, %v769
    %v771 = vpop.f32.mrf.mxu0
    %v772 = vpop.f32.mrf.mxu0
    %v773 = vadd.f32 %v724, %v772
    %v774 = vpop.f32.mrf.mxu0
    %775 = vmatprep.mubr.bf16.mxu0 0
    %776 = vmatmul.mubr.bf16.gmra.mxu0 %v491
    %v777 = vpop.f32.mrf.mxu0
    %v778 = vadd.f32 %v729, %v777
    %v779 = vpop.f32.mrf.mxu0
    %v780 = vpop.f32.mrf.mxu0
    %v781 = vadd.f32 %v732, %v780
    %v782 = vpop.f32.mrf.mxu0
    %783 = vdwg.mxu0
    %v784 = vadd.f32 %v770, %v773
    %v785 = vadd.f32 %v784, %v778
    %v786 = vadd.f32 %v785, %v781
    %v787 = vrot.slane %v786, 4
    %v788 = vadd.f32 %v786, %v787
    %v789 = vrot.slane %v788, 2
    %v790 = vadd.f32 %v788, %v789
    %v791 = vrot.slane %v790, 1
    %v792 = vadd.f32 %v790, %v791
    %v793 = vmul.f32 %v770, %v770
    %v794 = vmul.f32 %v773, %v773
    %v795 = vmul.f32 %v778, %v778
    %v796 = vmul.f32 %v781, %v781
    %v797 = vadd.f32 %v793, %v794
    %v798 = vadd.f32 %v797, %v795
    %v799 = vadd.f32 %v798, %v796
    %v800 = vrot.slane %v799, 4
    %v801 = vadd.f32 %v799, %v800
    %v802 = vrot.slane %v801, 2
    %v803 = vadd.f32 %v801, %v802
    %v804 = vrot.slane %v803, 1
    %v805 = vadd.f32 %v803, %v804
    %v806 = vmul.f32 %v792, 0.03125
    %v807 = vmul.f32 %v805, 0.03125
    %v808 = vmul.f32 %v806, %v806
    %v809 = vsub.f32 %v807, %v808
    %v810 = vmax.f32 %v809, 0.0
    %v811 = vld [vmem:[%s5] sm:$0x1]
    %v812 = vadd.f32 %v810, 1e-05
    %v813 = vrsqrt.pop %v812
    %v814 = vmul.f32 %v811, %v813
    %v815 = vld [vmem:[%s6] sm:$0x1]
    %v816 = vmul.f32 %v806, %v814
    %v817 = vsub.f32 %v815, %v816
    %v819 = vlaneseq
    %v820 = vshrl.u32 %v819, 7
    %v821 = vsub.s32 0, %v820
    %v822 = vrot.slane %v814, %v821
    %v824 = vmul.f32 %v770, %v822
    %v825 = vmul.f32 %v773, %v822
    %v826 = vmul.f32 %v778, %v822
    %v827 = vmul.f32 %v781, %v822
    %v829 = vlaneseq
    %v830 = vshrl.u32 %v829, 7
    %v831 = vsub.s32 0, %v830
    %v832 = vrot.slane %v817, %v831
    %v834 = vadd.f32 %v824, %v832
    %v835 = vadd.f32 %v825, %v832
    %v836 = vadd.f32 %v826, %v832
    %v837 = vadd.f32 %v827, %v832
    %v838 = vadd.f32 %v834, %v69
    %v839 = vadd.f32 %v835, %v70
    %v840 = vadd.f32 %v836, %v71
    %v841 = vadd.f32 %v837, %v72
    %v842 = vmax.f32 %v838, 0.0
    %v843 = vmax.f32 %v839, 0.0
    %v844 = vmax.f32 %v840, 0.0
    %v845 = vmax.f32 %v841, 0.0
    %846 = vst [vmem:[#allocation8] sm:$0xff] %v842
    %847 = vst [vmem:[#allocation8 + $0x8] sm:$0xff] %v843
    %848 = vst [vmem:[#allocation8 + $0x10] sm:$0xff] %v844
    %849 = vst [vmem:[#allocation8 + $0x18] sm:$0xff] %v845
    // Predicated region
    $region42: #{tpu_custom_call.1} parent=1 // pred_check
      _
    $region43: #{tpu_custom_call.1} parent=1 // pred_check_branch
      %851 = sbr.rel (0) target = $region45
    $region44: #{tpu_custom_call.1} parent=1 // pred_region
      %s853 = ssub.s32 512, 512
      %854 = vsyncadd [#allocation4], %s853
      %s855 = sshll.u32 [#allocation8], 4
      %s856 = int_to_ptr.vmem [resolvable:$true] %s855
      %861 = dma.vmem_to_hbm [thread:$0]  %s856, 512, %s7, [#allocation4], 128, 128, 8
    $region45: #{tpu_custom_call.1} parent=1 // pred_fallthru
      _
    // Predicated region
    $region46: #{tpu_custom_call.1} parent=1 // pred_check
      _
    $region47: #{tpu_custom_call.1} parent=1 // pred_check_branch
      %863 = sbr.rel (0) target = $region49
    $region48: #{tpu_custom_call.1} parent=1 // pred_region
      %864 = dma.done [#allocation4], 512
    $region49: #{tpu_custom_call.1} parent=1 // pred_fallthru
      _
    %865 = vsyncpa [#allocation3], 1
    %866 = vsyncpa [#allocation6], 1
    %867 = vsyncpa [#allocation4], 1

</llo_original>
